<compile_context>
chip_gen: v6e
topology: v6e:2x2x1
jax: 0.10.0
libtpu: 0.0.40
codegen_flags: <defaults>
</compile_context>

<pallas_src>
import functools
import math

import jax
import jax.numpy as jnp
from jax.experimental import pallas as pl
from jax.experimental.pallas import tpu as pltpu


# ----------------------------- fused Pallas kernel ----------------------------

def _fused_decoder_kernel(num_layers, ids_ref, emb_ref, *rest):
    """Fused Embedding -> num_layers x LSTM cell -> Linear, single grid step.

    ids_ref: (B, 1) int32   token ids
    emb_ref: (V, E) f32     embedding table
    rest:    W_0, b_0, ..., W_{L-1}, b_{L-1},   W_l: (in_dim+H, 4H), b_l: (1, 4H)
             wfc (H, V), bfc (1, V),
             h_in (L, B, H), c_in (L, B, H),
             pred_out (B, V), h_out (L, B, H), c_out (L, B, H)
    """
    lstm_refs = rest[: 2 * num_layers]
    (wfc_ref, bfc_ref, h_in_ref, c_in_ref,
     pred_ref, h_out_ref, c_out_ref) = rest[2 * num_layers:]

    B = ids_ref.shape[0]
    V = emb_ref.shape[0]
    H = h_in_ref.shape[-1]

    # --- embedding lookup as one-hot matmul (table resident in VMEM) ---
    ids = ids_ref[...]                                              # (B, 1) int32
    lane = jax.lax.broadcasted_iota(jnp.int32, (B, V), 1)           # (B, V)
    one_hot = (lane == ids).astype(jnp.float32)
    x = jnp.dot(one_hot, emb_ref[...], preferred_element_type=jnp.float32)  # (B, E)
    # TODO(synk): nn.Dropout on the embedding is identity here (inference mode).

    # --- LSTM layers (seq_len == 1 => one cell step per layer) ---
    for l in range(num_layers):
        W = lstm_refs[2 * l][...]          # (in_dim + H, 4H)
        b = lstm_refs[2 * l + 1][...]      # (1, 4H)
        h_prev = h_in_ref[l]               # (B, H)
        c_prev = c_in_ref[l]               # (B, H)

        xh = jnp.concatenate([x, h_prev], axis=-1)                  # (B, in_dim + H)
        gates = jnp.dot(xh, W, preferred_element_type=jnp.float32) + b   # (B, 4H)

        # Two full-vreg transcendentals instead of four per-gate ones.
        sig = jax.nn.sigmoid(gates)
        th = jnp.tanh(gates)
        i_g = sig[:, 0 * H:1 * H]
        f_g = sig[:, 1 * H:2 * H]
        g_g = th[:, 2 * H:3 * H]
        o_g = sig[:, 3 * H:4 * H]

        c_new = f_g * c_prev + i_g * g_g
        h_new = o_g * jnp.tanh(c_new)

        h_out_ref[l] = h_new
        c_out_ref[l] = c_new
        x = h_new  # inter-layer dropout -> identity at inference

    # --- final Linear: (B, H) @ (H, V) + (1, V) ---
    pred_ref[...] = (jnp.dot(x, wfc_ref[...], preferred_element_type=jnp.float32)
                     + bfc_ref[...])


# ------------------------------ Decoder module --------------------------------

class PallasDecoder:
    def __init__(self, input_size, embedding_size, hidden_size, num_layers, p, key):
        self.input_size = input_size
        self.embedding_size = embedding_size
        self.hidden_size = hidden_size
        self.num_layers = num_layers
        self.p = p  # dropout prob; identity at inference

        k = 1.0 / math.sqrt(hidden_size)
        keys = jax.random.split(key, 2 + 4 * num_layers + 2)
        ki = iter(keys)

        # nn.Embedding(input_size, embedding_size): N(0, 1) init
        self.embedding = jax.random.normal(next(ki), (input_size, embedding_size),
                                           dtype=jnp.float32)

        # LSTM per-layer weights (PyTorch: U(-k, k)), gate order i, f, g, o.
        # Pre-transpose + concat on host: W_l = [w_ih.T ; w_hh.T] -> (in_dim + H, 4H)
        self.W, self.b = [], []
        for layer in range(num_layers):
            in_dim = embedding_size if layer == 0 else hidden_size
            w_ih = jax.random.uniform(next(ki), (4 * hidden_size, in_dim),
                                      minval=-k, maxval=k, dtype=jnp.float32)
            w_hh = jax.random.uniform(next(ki), (4 * hidden_size, hidden_size),
                                      minval=-k, maxval=k, dtype=jnp.float32)
            b_ih = jax.random.uniform(next(ki), (4 * hidden_size,),
                                      minval=-k, maxval=k, dtype=jnp.float32)
            b_hh = jax.random.uniform(next(ki), (4 * hidden_size,),
                                      minval=-k, maxval=k, dtype=jnp.float32)
            self.W.append(jnp.concatenate([w_ih.T, w_hh.T], axis=0))
            self.b.append((b_ih + b_hh).reshape(1, 4 * hidden_size))

        # nn.Linear(hidden_size, input_size): pre-transposed to (H, V)
        w_fc = jax.random.uniform(next(ki), (input_size, hidden_size),
                                  minval=-k, maxval=k, dtype=jnp.float32)
        self.w_fc_t = w_fc.T
        self.b_fc = jax.random.uniform(next(ki), (input_size,),
                                       minval=-k, maxval=k,
                                       dtype=jnp.float32).reshape(1, input_size)

    def __call__(self, x, hidden, cell):
        # x: (B,) int32 token ids  (PyTorch forward does x.unsqueeze(0) -> seq_len 1)
        B = x.shape[0]
        ids2d = x.astype(jnp.int32).reshape(B, 1)

        args = [ids2d, self.embedding]
        for layer in range(self.num_layers):
            args += [self.W[layer], self.b[layer]]
        args += [self.w_fc_t, self.b_fc, hidden, cell]

        vmem_spec = pl.BlockSpec(memory_space=pltpu.MemorySpace.VMEM)
        kernel = functools.partial(_fused_decoder_kernel, self.num_layers)

        # TODO(synk): in an autoregressive loop, add input_output_aliases so the new
        # (L,B,H) hidden/cell overwrite the incoming state buffers in place.
        preds, new_h, new_c = pl.pallas_call(
            kernel,
            in_specs=[vmem_spec] * len(args),
            out_specs=(vmem_spec, vmem_spec, vmem_spec),
            out_shape=(
                jax.ShapeDtypeStruct((B, self.input_size), jnp.float32),
                jax.ShapeDtypeStruct((self.num_layers, B, self.hidden_size), jnp.float32),
                jax.ShapeDtypeStruct((self.num_layers, B, self.hidden_size), jnp.float32),
            ),
        )(*args)
        return preds, new_h, new_c


# --------------------------- pure-JAX reference (check) ------------------------

def _reference_forward(dec, x, hidden, cell):
    emb = dec.embedding[x]                       # (B, E)
    layer_in = emb
    H = dec.hidden_size
    hs, cs = [], []
    for l in range(dec.num_layers):
        xh = jnp.concatenate([layer_in, hidden[l]], axis=-1)
        gates = xh @ dec.W[l] + dec.b[l]
        i = jax.nn.sigmoid(gates[:, 0 * H:1 * H])
        f = jax.nn.sigmoid(gates[:, 1 * H:2 * H])
        g = jnp.tanh(gates[:, 2 * H:3 * H])
        o = jax.nn.sigmoid(gates[:, 3 * H:4 * H])
        c_new = f * cell[l] + i * g
        h_new = o * jnp.tanh(c_new)
        hs.append(h_new)
        cs.append(c_new)
        layer_in = h_new
    preds = layer_in @ dec.w_fc_t + dec.b_fc
    return preds, jnp.stack(hs), jnp.stack(cs)


# ------------------------------------ main -------------------------------------

if __name__ == "__main__":
    input_size = 32       # vocab
    embedding_size = 32
    hidden_size = 32
    num_layers = 2
    p = 0.1
    batch = 8

    key = jax.random.PRNGKey(0)
    k_params, k_x, k_h, k_c = jax.random.split(key, 4)

    decoder = PallasDecoder(input_size, embedding_size, hidden_size,
                            num_layers, p, k_params)

    x = jax.random.randint(k_x, (batch,), 0, input_size, dtype=jnp.int32)
    hidden = jax.random.normal(k_h, (num_layers, batch, hidden_size), dtype=jnp.float32)
    cell = jax.random.normal(k_c, (num_layers, batch, hidden_size), dtype=jnp.float32)

    preds, new_hidden, new_cell = decoder(x, hidden, cell)
    jax.block_until_ready((preds, new_hidden, new_cell))

    assert preds.shape == (batch, input_size)
    assert new_hidden.shape == (num_layers, batch, hidden_size)
    assert new_cell.shape == (num_layers, batch, hidden_size)

    # correctness check vs. pure-JAX reference
    ref_p, ref_h, ref_c = _reference_forward(decoder, x, hidden, cell)
    assert bool(jnp.allclose(preds, ref_p, atol=1e-4, rtol=1e-4))
    assert bool(jnp.allclose(new_hidden, ref_h, atol=1e-4, rtol=1e-4))
    assert bool(jnp.allclose(new_cell, ref_c, atol=1e-4, rtol=1e-4))

    print("KERNEL_OK")
</pallas_src>

<mosaic_0001>
module attributes {stable_mosaic.version = 11 : i64} {
  func.func @_fused_decoder_kernel(%arg0: memref<8x1xi32, #tpu.memory_space<vmem>>, %arg1: memref<32x32xf32, #tpu.memory_space<vmem>>, %arg2: memref<64x128xf32, #tpu.memory_space<vmem>>, %arg3: memref<1x128xf32, #tpu.memory_space<vmem>>, %arg4: memref<64x128xf32, #tpu.memory_space<vmem>>, %arg5: memref<1x128xf32, #tpu.memory_space<vmem>>, %arg6: memref<32x32xf32, #tpu.memory_space<vmem>>, %arg7: memref<1x32xf32, #tpu.memory_space<vmem>>, %arg8: memref<2x8x32xf32, #tpu.memory_space<vmem>>, %arg9: memref<2x8x32xf32, #tpu.memory_space<vmem>>, %arg10: memref<8x32xf32, #tpu.memory_space<vmem>>, %arg11: memref<2x8x32xf32, #tpu.memory_space<vmem>>, %arg12: memref<2x8x32xf32, #tpu.memory_space<vmem>>) attributes {dimension_semantics = [], scalar_prefetch = 0 : i64, scratch_operands = 0 : i64, tpu.core_type = #tpu.core_type<tc>} {
    %c0 = arith.constant 0 : index
    %c0_0 = arith.constant 0 : index
    %0 = vector.load %arg0[%c0, %c0_0] : memref<8x1xi32, #tpu.memory_space<vmem>>, vector<8x1xi32>
    %1 = tpu.iota {dimensions = array<i32: 1>} : vector<8x32xi32>
    %2 = vector.broadcast %0 : vector<8x1xi32> to vector<8x32xi32>
    %3 = arith.cmpi eq, %1, %2 : vector<8x32xi32>
    %4 = arith.extui %3 : vector<8x32xi1> to vector<8x32xi32>
    %5 = arith.sitofp %4 : vector<8x32xi32> to vector<8x32xf32>
    %c0_1 = arith.constant 0 : index
    %c0_2 = arith.constant 0 : index
    %6 = vector.load %arg1[%c0_1, %c0_2] : memref<32x32xf32, #tpu.memory_space<vmem>>, vector<32x32xf32>
    %cst = arith.constant dense<0.000000e+00> : vector<8x32xf32>
    %7 = tpu.matmul %5, %6, %cst {dimension_numbers = #tpu.dot_dimension_numbers<[1], [0], [0], [1], [0, 0, 1, 1], [], []>} : vector<8x32xf32>, vector<32x32xf32>, vector<8x32xf32> -> vector<8x32xf32>
    %c0_3 = arith.constant 0 : index
    %c0_4 = arith.constant 0 : index
    %8 = vector.load %arg2[%c0_3, %c0_4] : memref<64x128xf32, #tpu.memory_space<vmem>>, vector<64x128xf32>
    %c0_5 = arith.constant 0 : index
    %c0_6 = arith.constant 0 : index
    %9 = vector.load %arg3[%c0_5, %c0_6] : memref<1x128xf32, #tpu.memory_space<vmem>>, vector<1x128xf32>
    %c0_7 = arith.constant 0 : index
    %c0_8 = arith.constant 0 : index
    %c0_9 = arith.constant 0 : index
    %10 = vector.load %arg8[%c0_7, %c0_8, %c0_9] : memref<2x8x32xf32, #tpu.memory_space<vmem>>, vector<1x8x32xf32>
    %11 = vector.shape_cast %10 : vector<1x8x32xf32> to vector<8x32xf32>
    %c0_10 = arith.constant 0 : index
    %c0_11 = arith.constant 0 : index
    %c0_12 = arith.constant 0 : index
    %12 = vector.load %arg9[%c0_10, %c0_11, %c0_12] : memref<2x8x32xf32, #tpu.memory_space<vmem>>, vector<1x8x32xf32>
    %13 = vector.shape_cast %12 : vector<1x8x32xf32> to vector<8x32xf32>
    %14 = tpu.concatenate %7, %11 in 1 : vector<8x32xf32>, vector<8x32xf32> -> vector<8x64xf32>
    %cst_13 = arith.constant dense<0.000000e+00> : vector<8x128xf32>
    %15 = tpu.matmul %14, %8, %cst_13 {dimension_numbers = #tpu.dot_dimension_numbers<[1], [0], [0], [1], [0, 0, 1, 1], [], []>} : vector<8x64xf32>, vector<64x128xf32>, vector<8x128xf32> -> vector<8x128xf32>
    %16 = vector.broadcast %9 : vector<1x128xf32> to vector<8x128xf32>
    %17 = arith.addf %15, %16 : vector<8x128xf32>
    %18 = arith.negf %17 : vector<8x128xf32>
    %19 = math.exp %18 : vector<8x128xf32>
    %cst_14 = arith.constant 1.000000e+00 : f32
    %20 = vector.broadcast %cst_14 : f32 to vector<8x128xf32>
    %21 = arith.addf %20, %19 : vector<8x128xf32>
    %22 = arith.divf %20, %21 : vector<8x128xf32>
    %23 = math.tanh %17 : vector<8x128xf32>
    %24 = vector.extract_strided_slice %22 {offsets = [0, 0], sizes = [8, 32], strides = [1, 1]} : vector<8x128xf32> to vector<8x32xf32>
    %25 = vector.extract_strided_slice %22 {offsets = [0, 32], sizes = [8, 32], strides = [1, 1]} : vector<8x128xf32> to vector<8x32xf32>
    %26 = vector.extract_strided_slice %23 {offsets = [0, 64], sizes = [8, 32], strides = [1, 1]} : vector<8x128xf32> to vector<8x32xf32>
    %27 = vector.extract_strided_slice %22 {offsets = [0, 96], sizes = [8, 32], strides = [1, 1]} : vector<8x128xf32> to vector<8x32xf32>
    %28 = arith.mulf %25, %13 : vector<8x32xf32>
    %29 = arith.mulf %24, %26 : vector<8x32xf32>
    %30 = arith.addf %28, %29 : vector<8x32xf32>
    %31 = math.tanh %30 : vector<8x32xf32>
    %32 = arith.mulf %27, %31 : vector<8x32xf32>
    %c0_15 = arith.constant 0 : index
    %c0_16 = arith.constant 0 : index
    %c0_17 = arith.constant 0 : index
    %33 = vector.load %arg11[%c0_15, %c0_16, %c0_17] : memref<2x8x32xf32, #tpu.memory_space<vmem>>, vector<1x8x32xf32>
    %34 = vector.shape_cast %33 : vector<1x8x32xf32> to vector<8x32xf32>
    %35 = vector.shape_cast %32 : vector<8x32xf32> to vector<1x8x32xf32>
    tpu.vector_store %arg11[%c0_15, %c0_16, %c0_17], %35 {strides = array<i32>} : memref<2x8x32xf32, #tpu.memory_space<vmem>>, vector<1x8x32xf32>,
    %c0_18 = arith.constant 0 : index
    %c0_19 = arith.constant 0 : index
    %c0_20 = arith.constant 0 : index
    %36 = vector.load %arg12[%c0_18, %c0_19, %c0_20] : memref<2x8x32xf32, #tpu.memory_space<vmem>>, vector<1x8x32xf32>
    %37 = vector.shape_cast %36 : vector<1x8x32xf32> to vector<8x32xf32>
    %38 = vector.shape_cast %30 : vector<8x32xf32> to vector<1x8x32xf32>
    tpu.vector_store %arg12[%c0_18, %c0_19, %c0_20], %38 {strides = array<i32>} : memref<2x8x32xf32, #tpu.memory_space<vmem>>, vector<1x8x32xf32>,
    %c0_21 = arith.constant 0 : index
    %c0_22 = arith.constant 0 : index
    %39 = vector.load %arg4[%c0_21, %c0_22] : memref<64x128xf32, #tpu.memory_space<vmem>>, vector<64x128xf32>
    %c0_23 = arith.constant 0 : index
    %c0_24 = arith.constant 0 : index
    %40 = vector.load %arg5[%c0_23, %c0_24] : memref<1x128xf32, #tpu.memory_space<vmem>>, vector<1x128xf32>
    %c1 = arith.constant 1 : index
    %c0_25 = arith.constant 0 : index
    %c0_26 = arith.constant 0 : index
    %41 = vector.load %arg8[%c1, %c0_25, %c0_26] : memref<2x8x32xf32, #tpu.memory_space<vmem>>, vector<1x8x32xf32>
    %42 = vector.shape_cast %41 : vector<1x8x32xf32> to vector<8x32xf32>
    %c1_27 = arith.constant 1 : index
    %c0_28 = arith.constant 0 : index
    %c0_29 = arith.constant 0 : index
    %43 = vector.load %arg9[%c1_27, %c0_28, %c0_29] : memref<2x8x32xf32, #tpu.memory_space<vmem>>, vector<1x8x32xf32>
    %44 = vector.shape_cast %43 : vector<1x8x32xf32> to vector<8x32xf32>
    %45 = tpu.concatenate %32, %42 in 1 : vector<8x32xf32>, vector<8x32xf32> -> vector<8x64xf32>
    %cst_30 = arith.constant dense<0.000000e+00> : vector<8x128xf32>
    %46 = tpu.matmul %45, %39, %cst_30 {dimension_numbers = #tpu.dot_dimension_numbers<[1], [0], [0], [1], [0, 0, 1, 1], [], []>} : vector<8x64xf32>, vector<64x128xf32>, vector<8x128xf32> -> vector<8x128xf32>
    %47 = vector.broadcast %40 : vector<1x128xf32> to vector<8x128xf32>
    %48 = arith.addf %46, %47 : vector<8x128xf32>
    %49 = arith.negf %48 : vector<8x128xf32>
    %50 = math.exp %49 : vector<8x128xf32>
    %cst_31 = arith.constant 1.000000e+00 : f32
    %51 = vector.broadcast %cst_31 : f32 to vector<8x128xf32>
    %52 = arith.addf %51, %50 : vector<8x128xf32>
    %53 = arith.divf %51, %52 : vector<8x128xf32>
    %54 = math.tanh %48 : vector<8x128xf32>
    %55 = vector.extract_strided_slice %53 {offsets = [0, 0], sizes = [8, 32], strides = [1, 1]} : vector<8x128xf32> to vector<8x32xf32>
    %56 = vector.extract_strided_slice %53 {offsets = [0, 32], sizes = [8, 32], strides = [1, 1]} : vector<8x128xf32> to vector<8x32xf32>
    %57 = vector.extract_strided_slice %54 {offsets = [0, 64], sizes = [8, 32], strides = [1, 1]} : vector<8x128xf32> to vector<8x32xf32>
    %58 = vector.extract_strided_slice %53 {offsets = [0, 96], sizes = [8, 32], strides = [1, 1]} : vector<8x128xf32> to vector<8x32xf32>
    %59 = arith.mulf %56, %44 : vector<8x32xf32>
    %60 = arith.mulf %55, %57 : vector<8x32xf32>
    %61 = arith.addf %59, %60 : vector<8x32xf32>
    %62 = math.tanh %61 : vector<8x32xf32>
    %63 = arith.mulf %58, %62 : vector<8x32xf32>
    %c1_32 = arith.constant 1 : index
    %c0_33 = arith.constant 0 : index
    %c0_34 = arith.constant 0 : index
    %64 = vector.load %arg11[%c1_32, %c0_33, %c0_34] : memref<2x8x32xf32, #tpu.memory_space<vmem>>, vector<1x8x32xf32>
    %65 = vector.shape_cast %64 : vector<1x8x32xf32> to vector<8x32xf32>
    %66 = vector.shape_cast %63 : vector<8x32xf32> to vector<1x8x32xf32>
    tpu.vector_store %arg11[%c1_32, %c0_33, %c0_34], %66 {strides = array<i32>} : memref<2x8x32xf32, #tpu.memory_space<vmem>>, vector<1x8x32xf32>,
    %c1_35 = arith.constant 1 : index
    %c0_36 = arith.constant 0 : index
    %c0_37 = arith.constant 0 : index
    %67 = vector.load %arg12[%c1_35, %c0_36, %c0_37] : memref<2x8x32xf32, #tpu.memory_space<vmem>>, vector<1x8x32xf32>
    %68 = vector.shape_cast %67 : vector<1x8x32xf32> to vector<8x32xf32>
    %69 = vector.shape_cast %61 : vector<8x32xf32> to vector<1x8x32xf32>
    tpu.vector_store %arg12[%c1_35, %c0_36, %c0_37], %69 {strides = array<i32>} : memref<2x8x32xf32, #tpu.memory_space<vmem>>, vector<1x8x32xf32>,
    %c0_38 = arith.constant 0 : index
    %c0_39 = arith.constant 0 : index
    %70 = vector.load %arg6[%c0_38, %c0_39] : memref<32x32xf32, #tpu.memory_space<vmem>>, vector<32x32xf32>
    %cst_40 = arith.constant dense<0.000000e+00> : vector<8x32xf32>
    %71 = tpu.matmul %63, %70, %cst_40 {dimension_numbers = #tpu.dot_dimension_numbers<[1], [0], [0], [1], [0, 0, 1, 1], [], []>} : vector<8x32xf32>, vector<32x32xf32>, vector<8x32xf32> -> vector<8x32xf32>
    %c0_41 = arith.constant 0 : index
    %c0_42 = arith.constant 0 : index
    %72 = vector.load %arg7[%c0_41, %c0_42] : memref<1x32xf32, #tpu.memory_space<vmem>>, vector<1x32xf32>
    %73 = vector.broadcast %72 : vector<1x32xf32> to vector<8x32xf32>
    %74 = arith.addf %71, %73 : vector<8x32xf32>
    %c0_43 = arith.constant 0 : index
    %c0_44 = arith.constant 0 : index
    %75 = vector.load %arg10[%c0_43, %c0_44] : memref<8x32xf32, #tpu.memory_space<vmem>>, vector<8x32xf32>
    tpu.vector_store %arg10[%c0_43, %c0_44], %74 {strides = array<i32>} : memref<8x32xf32, #tpu.memory_space<vmem>>, vector<8x32xf32>,
    return
  }
}

</mosaic_0001>

<llo_original>
// kernel: tpu_custom_call.1
$region0: #{tpu_custom_call.1}
  #allocation0 [shape = 'u32[]', space=smem, size = 0x4, offset = 0x4, fixed_abs, tag = 'smem constant byte address 0x4 - core index']
  #allocation1 [shape = 'u32[144,128]{1,0:T(1,128)}', space=vmem, size = 0x12000, scoped, tag = 'internal scratch']
  %s0 = inlined_call_operand.vmem [shape: s32[8,1], index: 0, kind: input, shape index: {}]
  %s1 = inlined_call_operand.hbm [shape: f32[32,32], index: 1, kind: input, shape index: {}]
  %s2 = inlined_call_operand.hbm [shape: f32[64,128], index: 2, kind: input, shape index: {}]
  %s3 = inlined_call_operand.vmem [shape: f32[1,128], index: 3, kind: input, shape index: {}]
  %s4 = inlined_call_operand.hbm [shape: f32[64,128], index: 4, kind: input, shape index: {}]
  %s5 = inlined_call_operand.vmem [shape: f32[1,128], index: 5, kind: input, shape index: {}]
  %s6 = inlined_call_operand.hbm [shape: f32[32,32], index: 6, kind: input, shape index: {}]
  %s7 = inlined_call_operand.vmem [shape: f32[1,32], index: 7, kind: input, shape index: {}]
  %s8 = inlined_call_operand.vmem [shape: f32[2,8,32], index: 8, kind: input, shape index: {}]
  %s9 = inlined_call_operand.hbm [shape: f32[2,8,32], index: 9, kind: input, shape index: {}]
  %s10 = inlined_call_operand.hbm [shape: f32[8,32], index: 10, kind: output, shape index: {0}]
  %s11 = inlined_call_operand.hbm [shape: f32[2,8,32], index: 11, kind: output, shape index: {1}]
  %s12 = inlined_call_operand.hbm [shape: f32[2,8,32], index: 12, kind: output, shape index: {2}]
  %13 = xla_tuple %s10, %s11, %s12
  %s14 = sld [smem:[#allocation0]]
  $region86: #{tpu_custom_call.1} parent=0
    _
  %s16 = ssub.s32 1, %s14
  %s17 = scalar_select 0, %s16, %s14
  $region1: #{tpu_custom_call.1} parent=0
    #allocation2 [shape = 'u8[16384]{0}', space=vmem, size = 0x4000, scoped, tag = 'input window, operand 1, single buffered']
    #allocation3 [shape = 's32[1]{0}', space=sflag, size = 0x4, scoped, tag = 'scoped memory for tpu_custom_call.1']
    #allocation4 [shape = 's32[1]{0}', space=sflag, size = 0x4, scoped, tag = 'scoped memory for tpu_custom_call.1']
    #allocation5 [shape = 'u8[32768]{0}', space=vmem, size = 0x8000, scoped, tag = 'input window, operand 2, single buffered']
    #allocation6 [shape = 's32[1]{0}', space=sflag, size = 0x4, scoped, tag = 'scoped memory for tpu_custom_call.1']
    #allocation7 [shape = 'u8[32768]{0}', space=vmem, size = 0x8000, scoped, tag = 'input window, operand 4, single buffered']
    #allocation8 [shape = 'u8[16384]{0}', space=vmem, size = 0x4000, scoped, tag = 'input window, operand 6, single buffered']
    #allocation9 [shape = 's32[1]{0}', space=sflag, size = 0x4, scoped, tag = 'scoped memory for tpu_custom_call.1']
    #allocation10 [shape = 'u8[8192]{0}', space=vmem, size = 0x2000, scoped, tag = 'input window, operand 9, single buffered']
    #allocation11 [shape = 'u8[4096]{0}', space=vmem, size = 0x1000, scoped, tag = 'output window, operand 0, single buffered']
    #allocation12 [shape = 'u8[8192]{0}', space=vmem, size = 0x2000, scoped, tag = 'output window, operand 1, single buffered']
    #allocation13 [shape = 's32[1]{0}', space=sflag, size = 0x4, scoped, tag = 'scoped memory for tpu_custom_call.1']
    #allocation14 [shape = 'u8[8192]{0}', space=vmem, size = 0x2000, scoped, tag = 'output window, operand 2, single buffered']
    %18 = vsyncpa [#allocation3], 0
    %19 = vsyncpa [#allocation6], 0
    %20 = vsyncpa [#allocation9], 0
    %21 = vsyncpa [#allocation4], 0
    %22 = vsyncpa [#allocation13], 0
    // Predicated region
    $region2: #{tpu_custom_call.1} parent=1 // pred_check
      _
    $region3: #{tpu_custom_call.1} parent=1 // pred_check_branch
      %24 = sbr.rel (0) target = $region5
    $region4: #{tpu_custom_call.1} parent=1 // pred_region
      _
    $region5: #{tpu_custom_call.1} parent=1 // pred_fallthru
      _
    // Predicated region
    $region6: #{tpu_custom_call.1} parent=1 // pred_check
      _
    $region7: #{tpu_custom_call.1} parent=1 // pred_check_branch
      %26 = sbr.rel (0) target = $region9
    $region8: #{tpu_custom_call.1} parent=1 // pred_region
      %s28 = ssub.s32 512, 512
      %29 = vsyncadd [#allocation3], %s28
      %s30 = sshll.u32 [#allocation2], 4
      %s31 = int_to_ptr.vmem [resolvable:$true] %s30
      %36 = dma.hbm_to_vmem [thread:$0]  %s1, 512, %s31, [#allocation3], 128, 128, 8
    $region9: #{tpu_custom_call.1} parent=1 // pred_fallthru
      _
    // Predicated region
    $region10: #{tpu_custom_call.1} parent=1 // pred_check
      _
    $region11: #{tpu_custom_call.1} parent=1 // pred_check_branch
      %38 = sbr.rel (0) target = $region13
    $region12: #{tpu_custom_call.1} parent=1 // pred_region
      %s40 = ssub.s32 1024, 1024
      %41 = vsyncadd [#allocation6], %s40
      %s42 = sshll.u32 [#allocation5], 4
      %s43 = int_to_ptr.vmem [resolvable:$true] %s42
      %48 = dma.hbm_to_vmem [thread:$0]  %s2, 1024, %s43, [#allocation6], 128, 128, 8
    $region13: #{tpu_custom_call.1} parent=1 // pred_fallthru
      _
    // Predicated region
    $region14: #{tpu_custom_call.1} parent=1 // pred_check
      _
    $region15: #{tpu_custom_call.1} parent=1 // pred_check_branch
      %50 = sbr.rel (0) target = $region17
    $region16: #{tpu_custom_call.1} parent=1 // pred_region
      _
    $region17: #{tpu_custom_call.1} parent=1 // pred_fallthru
      _
    // Predicated region
    $region18: #{tpu_custom_call.1} parent=1 // pred_check
      _
    $region19: #{tpu_custom_call.1} parent=1 // pred_check_branch
      %52 = sbr.rel (0) target = $region21
    $region20: #{tpu_custom_call.1} parent=1 // pred_region
      %s54 = ssub.s32 1024, 1024
      %55 = vsyncadd [#allocation6], %s54
      %s56 = sshll.u32 [#allocation7], 4
      %s57 = int_to_ptr.vmem [resolvable:$true] %s56
      %62 = dma.hbm_to_vmem [thread:$0]  %s4, 1024, %s57, [#allocation6], 128, 128, 8
    $region21: #{tpu_custom_call.1} parent=1 // pred_fallthru
      _
    // Predicated region
    $region22: #{tpu_custom_call.1} parent=1 // pred_check
      _
    $region23: #{tpu_custom_call.1} parent=1 // pred_check_branch
      %64 = sbr.rel (0) target = $region25
    $region24: #{tpu_custom_call.1} parent=1 // pred_region
      _
    $region25: #{tpu_custom_call.1} parent=1 // pred_fallthru
      _
    // Predicated region
    $region26: #{tpu_custom_call.1} parent=1 // pred_check
      _
    $region27: #{tpu_custom_call.1} parent=1 // pred_check_branch
      %66 = sbr.rel (0) target = $region29
    $region28: #{tpu_custom_call.1} parent=1 // pred_region
      %s68 = ssub.s32 512, 512
      %69 = vsyncadd [#allocation9], %s68
      %s70 = sshll.u32 [#allocation8], 4
      %s71 = int_to_ptr.vmem [resolvable:$true] %s70
      %76 = dma.hbm_to_vmem [thread:$0]  %s6, 512, %s71, [#allocation9], 128, 128, 8
    $region29: #{tpu_custom_call.1} parent=1 // pred_fallthru
      _
    // Predicated region
    $region30: #{tpu_custom_call.1} parent=1 // pred_check
      _
    $region31: #{tpu_custom_call.1} parent=1 // pred_check_branch
      %78 = sbr.rel (0) target = $region33
    $region32: #{tpu_custom_call.1} parent=1 // pred_region
      _
    $region33: #{tpu_custom_call.1} parent=1 // pred_fallthru
      _
    // Predicated region
    $region34: #{tpu_custom_call.1} parent=1 // pred_check
      _
    $region35: #{tpu_custom_call.1} parent=1 // pred_check_branch
      %80 = sbr.rel (0) target = $region37
    $region36: #{tpu_custom_call.1} parent=1 // pred_region
      _
    $region37: #{tpu_custom_call.1} parent=1 // pred_fallthru
      _
    // Predicated region
    $region38: #{tpu_custom_call.1} parent=1 // pred_check
      _
    $region39: #{tpu_custom_call.1} parent=1 // pred_check_branch
      %82 = sbr.rel (0) target = $region41
    $region40: #{tpu_custom_call.1} parent=1 // pred_region
      %s84 = ssub.s32 256, 256
      %85 = vsyncadd [#allocation9], %s84
      %s86 = sshll.u32 [#allocation10], 4
      %s87 = int_to_ptr.vmem [resolvable:$true] %s86
      %92 = dma.hbm_to_vmem [thread:$0]  %s9, 256, %s87, [#allocation9], 128, 128, 8
    $region41: #{tpu_custom_call.1} parent=1 // pred_fallthru
      _
    // Predicated region
    $region42: #{tpu_custom_call.1} parent=1 // pred_check
      _
    $region43: #{tpu_custom_call.1} parent=1 // pred_check_branch
      %94 = sbr.rel (0) target = $region45
    $region44: #{tpu_custom_call.1} parent=1 // pred_region
      %95 = dma.done [#allocation3], 512
    $region45: #{tpu_custom_call.1} parent=1 // pred_fallthru
      _
    // Predicated region
    $region46: #{tpu_custom_call.1} parent=1 // pred_check
      _
    $region47: #{tpu_custom_call.1} parent=1 // pred_check_branch
      %97 = sbr.rel (0) target = $region49
    $region48: #{tpu_custom_call.1} parent=1 // pred_region
      %98 = dma.done [#allocation6], 1024
    $region49: #{tpu_custom_call.1} parent=1 // pred_fallthru
      _
    // Predicated region
    $region50: #{tpu_custom_call.1} parent=1 // pred_check
      _
    $region51: #{tpu_custom_call.1} parent=1 // pred_check_branch
      %100 = sbr.rel (0) target = $region53
    $region52: #{tpu_custom_call.1} parent=1 // pred_region
      %101 = dma.done [#allocation6], 1024
    $region53: #{tpu_custom_call.1} parent=1 // pred_fallthru
      _
    // Predicated region
    $region54: #{tpu_custom_call.1} parent=1 // pred_check
      _
    $region55: #{tpu_custom_call.1} parent=1 // pred_check_branch
      %103 = sbr.rel (0) target = $region57
    $region56: #{tpu_custom_call.1} parent=1 // pred_region
      %104 = dma.done [#allocation9], 512
    $region57: #{tpu_custom_call.1} parent=1 // pred_fallthru
      _
    // Predicated region
    $region58: #{tpu_custom_call.1} parent=1 // pred_check
      _
    $region59: #{tpu_custom_call.1} parent=1 // pred_check_branch
      %106 = sbr.rel (0) target = $region61
    $region60: #{tpu_custom_call.1} parent=1 // pred_region
      %107 = dma.done [#allocation9], 256
    $region61: #{tpu_custom_call.1} parent=1 // pred_fallthru
      _
    %v108 = vld [vmem:[%s0] sm:$0xff]
    %v109 = vlaneseq
    %v110 = vand.u32 %v109, 127
    %111 = vset.pattern.permute.xlu0 0
    %112 = vperm.xlu0 %111, %v108
    %v113 = vpop.permute.xlu0 %112
    %vm114 = vcmp.eq.s32.totalorder %v110, %v113
    %v115 = vsel %vm114, 1, 0
    %v116 = vcvt.s32.f32 %v115
    %v117 = vld [vmem:[#allocation2] sm:$0xff]
    %v118 = vld [vmem:[#allocation2 + $0x8] sm:$0xff]
    %v119 = vld [vmem:[#allocation2 + $0x10] sm:$0xff]
    %v120 = vld [vmem:[#allocation2 + $0x18] sm:$0xff]
    %vm121 = vcmask 261120
    %v123 = vsel %vm121, %v116, 0
    %125 = vmatprep.subr.mxu0 0.0
    %126 = vmatpush1.msra.mxu0 0.0
    %127 = vmatprep.subr.mxu0 0.0
    %128 = vmatpush1.msra.mxu0 0.0
    %129 = vmatprep.subr.mxu0 0.0
    %130 = vmatpush1.msra.mxu0 0.0
    %131 = vmatprep.subr.mxu0 0.0
    %132 = vmatpush1.msra.mxu0 0.0
    %133 = vmatprep.subr.mxu0 0.0
    %134 = vmatpush1.msra.mxu0 0.0
    %135 = vmatprep.subr.mxu0 0.0
    %136 = vmatpush1.msra.mxu0 0.0
    %137 = vmatprep.subr.mxu0 0.0
    %138 = vmatpush1.msra.mxu0 0.0
    %139 = vmatprep.subr.mxu0 0.0
    %140 = vmatpush1.msra.mxu0 0.0
    %141 = vmatprep.subr.mxu0 0.0
    %142 = vmatpush1.msra.mxu0 0.0
    %143 = vmatprep.subr.mxu0 0.0
    %144 = vmatpush1.msra.mxu0 0.0
    %145 = vmatprep.subr.mxu0 0.0
    %146 = vmatpush1.msra.mxu0 0.0
    %147 = vmatprep.subr.mxu0 0.0
    %148 = vmatpush1.msra.mxu0 0.0
    %149 = vmatprep.subr.mxu0 0.0
    %150 = vmatpush1.msra.mxu0 %v120
    %151 = vmatprep.subr.mxu0 0.0
    %152 = vmatpush1.msra.mxu0 %v119
    %153 = vmatprep.subr.mxu0 0.0
    %154 = vmatpush1.msra.mxu0 %v118
    %155 = vmatprep.subr.mxu0 0.0
    %156 = vmatpush1.msra.mxu0 %v117
    %157 = vmatprep.subr.mxu0 0.0
    %158 = vmatpush2.msra.mxu0 0.0
    %159 = vmatprep.subr.mxu0 0.0
    %160 = vmatpush2.msra.mxu0 0.0
    %161 = vmatprep.subr.mxu0 0.0
    %162 = vmatpush2.msra.mxu0 0.0
    %163 = vmatprep.subr.mxu0 0.0
    %164 = vmatpush2.msra.mxu0 0.0
    %165 = vmatprep.subr.mxu0 0.0
    %166 = vmatpush2.msra.mxu0 0.0
    %167 = vmatprep.subr.mxu0 0.0
    %168 = vmatpush2.msra.mxu0 0.0
    %169 = vmatprep.subr.mxu0 0.0
    %170 = vmatpush2.msra.mxu0 0.0
    %171 = vmatprep.subr.mxu0 0.0
    %172 = vmatpush2.msra.mxu0 0.0
    %173 = vmatprep.subr.mxu0 0.0
    %174 = vmatpush2.msra.mxu0 0.0
    %175 = vmatprep.subr.mxu0 0.0
    %176 = vmatpush2.msra.mxu0 0.0
    %177 = vmatprep.subr.mxu0 0.0
    %178 = vmatpush2.msra.mxu0 0.0
    %179 = vmatprep.subr.mxu0 0.0
    %180 = vmatpush2.msra.mxu0 0.0
    %181 = vmatprep.subr.mxu0 0.0
    %182 = vmatpush2.msra.mxu0 0.0
    %183 = vmatprep.subr.mxu0 0.0
    %184 = vmatpush2.msra.mxu0 0.0
    %185 = vmatprep.subr.mxu0 0.0
    %186 = vmatpush2.msra.mxu0 0.0
    %187 = vmatprep.subr.mxu0 0.0
    %188 = vmatpush2.msra.mxu0 0.0
    %189 = vmatprep.mubr.f32.mxu0 0.0
    %190 = vmatmul.mubr.f32.gmra.mxu0 %v123
    %v191 = vpop.f32.mrf.mxu0
    %v192 = vadd.f32 0.0, %v191
    %v193 = vpop.f32.mrf.mxu0
    %194 = vdwg.mxu0
    %v195 = vld [vmem:[#allocation5] sm:$0xff]
    %v196 = vld [vmem:[#allocation5 + $0x8] sm:$0xff]
    %v197 = vld [vmem:[#allocation5 + $0x10] sm:$0xff]
    %v198 = vld [vmem:[#allocation5 + $0x18] sm:$0xff]
    %v199 = vld [vmem:[#allocation5 + $0x20] sm:$0xff]
    %v200 = vld [vmem:[#allocation5 + $0x28] sm:$0xff]
    %v201 = vld [vmem:[#allocation5 + $0x30] sm:$0xff]
    %v202 = vld [vmem:[#allocation5 + $0x38] sm:$0xff]
    %v203 = vld [vmem:[%s3] sm:$0x1]
    %v204 = vld [vmem:[%s8] sm:$0xff]
    %v205 = vld [vmem:[#allocation10] sm:$0xff]
    %207 = vrot.lane.b32.xlu0 %v204, 32
    %v208 = vpop.permute.xlu0 %207
    %v210 = vsel %vm121, %v192, %v208
    %v212 = vlaneseq
    %v213 = vshrl.u32 %v212, 7
    %v214 = vsub.s32 0, %v213
    %v215 = vrot.slane %v203, %v214
    %vm217 = vcmask 523264
    %v219 = vsel %vm217, %v210, 0
    %221 = vmatprep.subr.mxu0 0.0
    %222 = vmatpush1.msra.mxu0 0.0
    %223 = vmatprep.subr.mxu0 0.0
    %224 = vmatpush1.msra.mxu0 0.0
    %225 = vmatprep.subr.mxu0 0.0
    %226 = vmatpush1.msra.mxu0 0.0
    %227 = vmatprep.subr.mxu0 0.0
    %228 = vmatpush1.msra.mxu0 0.0
    %229 = vmatprep.subr.mxu0 0.0
    %230 = vmatpush1.msra.mxu0 0.0
    %231 = vmatprep.subr.mxu0 0.0
    %232 = vmatpush1.msra.mxu0 0.0
    %233 = vmatprep.subr.mxu0 0.0
    %234 = vmatpush1.msra.mxu0 0.0
    %235 = vmatprep.subr.mxu0 0.0
    %236 = vmatpush1.msra.mxu0 0.0
    %237 = vmatprep.subr.mxu0 0.0
    %238 = vmatpush1.msra.mxu0 %v202
    %239 = vmatprep.subr.mxu0 0.0
    %240 = vmatpush1.msra.mxu0 %v201
    %241 = vmatprep.subr.mxu0 0.0
    %242 = vmatpush1.msra.mxu0 %v200
    %243 = vmatprep.subr.mxu0 0.0
    %244 = vmatpush1.msra.mxu0 %v199
    %245 = vmatprep.subr.mxu0 0.0
    %246 = vmatpush1.msra.mxu0 %v198
    %247 = vmatprep.subr.mxu0 0.0
    %248 = vmatpush1.msra.mxu0 %v197
    %249 = vmatprep.subr.mxu0 0.0
    %250 = vmatpush1.msra.mxu0 %v196
    %251 = vmatprep.subr.mxu0 0.0
    %252 = vmatpush1.msra.mxu0 %v195
    %253 = vmatprep.subr.mxu0 0.0
    %254 = vmatpush2.msra.mxu0 0.0
    %255 = vmatprep.subr.mxu0 0.0
    %256 = vmatpush2.msra.mxu0 0.0
    %257 = vmatprep.subr.mxu0 0.0
    %258 = vmatpush2.msra.mxu0 0.0
    %259 = vmatprep.subr.mxu0 0.0
    %260 = vmatpush2.msra.mxu0 0.0
    %261 = vmatprep.subr.mxu0 0.0
    %262 = vmatpush2.msra.mxu0 0.0
    %263 = vmatprep.subr.mxu0 0.0
    %264 = vmatpush2.msra.mxu0 0.0
    %265 = vmatprep.subr.mxu0 0.0
    %266 = vmatpush2.msra.mxu0 0.0
    %267 = vmatprep.subr.mxu0 0.0
    %268 = vmatpush2.msra.mxu0 0.0
    %269 = vmatprep.subr.mxu0 0.0
    %270 = vmatpush2.msra.mxu0 0.0
    %271 = vmatprep.subr.mxu0 0.0
    %272 = vmatpush2.msra.mxu0 0.0
    %273 = vmatprep.subr.mxu0 0.0
    %274 = vmatpush2.msra.mxu0 0.0
    %275 = vmatprep.subr.mxu0 0.0
    %276 = vmatpush2.msra.mxu0 0.0
    %277 = vmatprep.subr.mxu0 0.0
    %278 = vmatpush2.msra.mxu0 0.0
    %279 = vmatprep.subr.mxu0 0.0
    %280 = vmatpush2.msra.mxu0 0.0
    %281 = vmatprep.subr.mxu0 0.0
    %282 = vmatpush2.msra.mxu0 0.0
    %283 = vmatprep.subr.mxu0 0.0
    %284 = vmatpush2.msra.mxu0 0.0
    %285 = vmatprep.mubr.f32.mxu0 0.0
    %286 = vmatmul.mubr.f32.gmra.mxu0 %v219
    %v287 = vpop.f32.mrf.mxu0
    %v288 = vadd.f32 %v215, %v287
    %v289 = vpop.f32.mrf.mxu0
    %290 = vdwg.mxu0
    %v291 = vxor.u32 %v288, 2147483648
    %v292 = vmul.f32 %v291, 1.442695
    %v293 = vpow.pop %v292
    %v294 = vadd.f32 %v293, 1.0
    %v295 = vrcp.pop %v294
    %v296 = vmul.f32 1.0, %v295
    %v297 = vtanh.pop %v288
    %299 = vrot.lane.b32.xlu0 %v205, 32
    %v300 = vpop.permute.xlu0 %299
    %v302 = vmul.f32 %v296, %v300
    %304 = vrot.lane.b32.xlu0 %v297, 64
    %v305 = vpop.permute.xlu0 %304
    %v307 = vmul.f32 %v296, %v305
    %309 = vrot.lane.b32.xlu0 %v307, 32
    %v310 = vpop.permute.xlu0 %309
    %v312 = vadd.f32 %v302, %v310
    %v313 = vtanh.pop %v312
    %315 = vrot.lane.b32.xlu0 %v313, 64
    %v316 = vpop.permute.xlu0 %315
    %v318 = vmul.f32 %v296, %v316
    %320 = vrot.lane.b32.xlu0 %v318, 32
    %v321 = vpop.permute.xlu0 %320
    %323 = vst.msk [vmem:[#allocation12] sm:$0xff] %vm121, %v321
    %325 = vrot.lane.b32.xlu0 %v312, 96
    %v326 = vpop.permute.xlu0 %325
    %328 = vst.msk [vmem:[#allocation14] sm:$0xff] %vm121, %v326
    %v329 = vld [vmem:[#allocation7] sm:$0xff]
    %v330 = vld [vmem:[#allocation7 + $0x8] sm:$0xff]
    %v331 = vld [vmem:[#allocation7 + $0x10] sm:$0xff]
    %v332 = vld [vmem:[#allocation7 + $0x18] sm:$0xff]
    %v333 = vld [vmem:[#allocation7 + $0x20] sm:$0xff]
    %v334 = vld [vmem:[#allocation7 + $0x28] sm:$0xff]
    %v335 = vld [vmem:[#allocation7 + $0x30] sm:$0xff]
    %v336 = vld [vmem:[#allocation7 + $0x38] sm:$0xff]
    %v337 = vld [vmem:[%s5] sm:$0x1]
    %s338 = scalar_lea.vmem %s8, 8
    %v339 = vld [vmem:[%s338] sm:$0xff]
    %s340 = scalar_lea.vmem [#allocation10], 8
    %v341 = vld [vmem:[%s340] sm:$0xff]
    %343 = vrot.lane.b32.xlu0 %v339, 32
    %v344 = vpop.permute.xlu0 %343
    %v346 = vsel %vm121, %v321, %v344
    %v348 = vlaneseq
    %v349 = vshrl.u32 %v348, 7
    %v350 = vsub.s32 0, %v349
    %v351 = vrot.slane %v337, %v350
    %v354 = vsel %vm217, %v346, 0
    %356 = vmatprep.subr.mxu0 0.0
    %357 = vmatpush1.msra.mxu0 0.0
    %358 = vmatprep.subr.mxu0 0.0
    %359 = vmatpush1.msra.mxu0 0.0
    %360 = vmatprep.subr.mxu0 0.0
    %361 = vmatpush1.msra.mxu0 0.0
    %362 = vmatprep.subr.mxu0 0.0
    %363 = vmatpush1.msra.mxu0 0.0
    %364 = vmatprep.subr.mxu0 0.0
    %365 = vmatpush1.msra.mxu0 0.0
    %366 = vmatprep.subr.mxu0 0.0
    %367 = vmatpush1.msra.mxu0 0.0
    %368 = vmatprep.subr.mxu0 0.0
    %369 = vmatpush1.msra.mxu0 0.0
    %370 = vmatprep.subr.mxu0 0.0
    %371 = vmatpush1.msra.mxu0 0.0
    %372 = vmatprep.subr.mxu0 0.0
    %373 = vmatpush1.msra.mxu0 %v336
    %374 = vmatprep.subr.mxu0 0.0
    %375 = vmatpush1.msra.mxu0 %v335
    %376 = vmatprep.subr.mxu0 0.0
    %377 = vmatpush1.msra.mxu0 %v334
    %378 = vmatprep.subr.mxu0 0.0
    %379 = vmatpush1.msra.mxu0 %v333
    %380 = vmatprep.subr.mxu0 0.0
    %381 = vmatpush1.msra.mxu0 %v332
    %382 = vmatprep.subr.mxu0 0.0
    %383 = vmatpush1.msra.mxu0 %v331
    %384 = vmatprep.subr.mxu0 0.0
    %385 = vmatpush1.msra.mxu0 %v330
    %386 = vmatprep.subr.mxu0 0.0
    %387 = vmatpush1.msra.mxu0 %v329
    %388 = vmatprep.subr.mxu0 0.0
    %389 = vmatpush2.msra.mxu0 0.0
    %390 = vmatprep.subr.mxu0 0.0
    %391 = vmatpush2.msra.mxu0 0.0
    %392 = vmatprep.subr.mxu0 0.0
    %393 = vmatpush2.msra.mxu0 0.0
    %394 = vmatprep.subr.mxu0 0.0
    %395 = vmatpush2.msra.mxu0 0.0
    %396 = vmatprep.subr.mxu0 0.0
    %397 = vmatpush2.msra.mxu0 0.0
    %398 = vmatprep.subr.mxu0 0.0
    %399 = vmatpush2.msra.mxu0 0.0
    %400 = vmatprep.subr.mxu0 0.0
    %401 = vmatpush2.msra.mxu0 0.0
    %402 = vmatprep.subr.mxu0 0.0
    %403 = vmatpush2.msra.mxu0 0.0
    %404 = vmatprep.subr.mxu0 0.0
    %405 = vmatpush2.msra.mxu0 0.0
    %406 = vmatprep.subr.mxu0 0.0
    %407 = vmatpush2.msra.mxu0 0.0
    %408 = vmatprep.subr.mxu0 0.0
    %409 = vmatpush2.msra.mxu0 0.0
    %410 = vmatprep.subr.mxu0 0.0
    %411 = vmatpush2.msra.mxu0 0.0
    %412 = vmatprep.subr.mxu0 0.0
    %413 = vmatpush2.msra.mxu0 0.0
    %414 = vmatprep.subr.mxu0 0.0
    %415 = vmatpush2.msra.mxu0 0.0
    %416 = vmatprep.subr.mxu0 0.0
    %417 = vmatpush2.msra.mxu0 0.0
    %418 = vmatprep.subr.mxu0 0.0
    %419 = vmatpush2.msra.mxu0 0.0
    %420 = vmatprep.mubr.f32.mxu0 0.0
    %421 = vmatmul.mubr.f32.gmra.mxu0 %v354
    %v422 = vpop.f32.mrf.mxu0
    %v423 = vadd.f32 %v351, %v422
    %v424 = vpop.f32.mrf.mxu0
    %425 = vdwg.mxu0
    %v426 = vxor.u32 %v423, 2147483648
    %v427 = vmul.f32 %v426, 1.442695
    %v428 = vpow.pop %v427
    %v429 = vadd.f32 %v428, 1.0
    %v430 = vrcp.pop %v429
    %v431 = vmul.f32 1.0, %v430
    %v432 = vtanh.pop %v423
    %434 = vrot.lane.b32.xlu0 %v341, 32
    %v435 = vpop.permute.xlu0 %434
    %v437 = vmul.f32 %v431, %v435
    %439 = vrot.lane.b32.xlu0 %v432, 64
    %v440 = vpop.permute.xlu0 %439
    %v442 = vmul.f32 %v431, %v440
    %444 = vrot.lane.b32.xlu0 %v442, 32
    %v445 = vpop.permute.xlu0 %444
    %v447 = vadd.f32 %v437, %v445
    %v448 = vtanh.pop %v447
    %450 = vrot.lane.b32.xlu0 %v448, 64
    %v451 = vpop.permute.xlu0 %450
    %v453 = vmul.f32 %v431, %v451
    %455 = vrot.lane.b32.xlu0 %v453, 32
    %v456 = vpop.permute.xlu0 %455
    %s458 = scalar_lea.vmem [#allocation12], 8
    %459 = vst.msk [vmem:[%s458] sm:$0xff] %vm121, %v456
    %461 = vrot.lane.b32.xlu0 %v447, 96
    %v462 = vpop.permute.xlu0 %461
    %s464 = scalar_lea.vmem [#allocation14], 8
    %465 = vst.msk [vmem:[%s464] sm:$0xff] %vm121, %v462
    %v466 = vld [vmem:[#allocation8] sm:$0xff]
    %v467 = vld [vmem:[#allocation8 + $0x8] sm:$0xff]
    %v468 = vld [vmem:[#allocation8 + $0x10] sm:$0xff]
    %v469 = vld [vmem:[#allocation8 + $0x18] sm:$0xff]
    %v470 = vld [vmem:[%s7] sm:$0x1]
    %v472 = vlaneseq
    %v473 = vshrl.u32 %v472, 7
    %v474 = vsub.s32 0, %v473
    %v475 = vrot.slane %v470, %v474
    %v477 = vsel %vm121, %v456, 0
    %479 = vmatprep.subr.mxu0 0.0
    %480 = vmatpush1.msra.mxu0 0.0
    %481 = vmatprep.subr.mxu0 0.0
    %482 = vmatpush1.msra.mxu0 0.0
    %483 = vmatprep.subr.mxu0 0.0
    %484 = vmatpush1.msra.mxu0 0.0
    %485 = vmatprep.subr.mxu0 0.0
    %486 = vmatpush1.msra.mxu0 0.0
    %487 = vmatprep.subr.mxu0 0.0
    %488 = vmatpush1.msra.mxu0 0.0
    %489 = vmatprep.subr.mxu0 0.0
    %490 = vmatpush1.msra.mxu0 0.0
    %491 = vmatprep.subr.mxu0 0.0
    %492 = vmatpush1.msra.mxu0 0.0
    %493 = vmatprep.subr.mxu0 0.0
    %494 = vmatpush1.msra.mxu0 0.0
    %495 = vmatprep.subr.mxu0 0.0
    %496 = vmatpush1.msra.mxu0 0.0
    %497 = vmatprep.subr.mxu0 0.0
    %498 = vmatpush1.msra.mxu0 0.0
    %499 = vmatprep.subr.mxu0 0.0
    %500 = vmatpush1.msra.mxu0 0.0
    %501 = vmatprep.subr.mxu0 0.0
    %502 = vmatpush1.msra.mxu0 0.0
    %503 = vmatprep.subr.mxu0 0.0
    %504 = vmatpush1.msra.mxu0 %v469
    %505 = vmatprep.subr.mxu0 0.0
    %506 = vmatpush1.msra.mxu0 %v468
    %507 = vmatprep.subr.mxu0 0.0
    %508 = vmatpush1.msra.mxu0 %v467
    %509 = vmatprep.subr.mxu0 0.0
    %510 = vmatpush1.msra.mxu0 %v466
    %511 = vmatprep.subr.mxu0 0.0
    %512 = vmatpush2.msra.mxu0 0.0
    %513 = vmatprep.subr.mxu0 0.0
    %514 = vmatpush2.msra.mxu0 0.0
    %515 = vmatprep.subr.mxu0 0.0
    %516 = vmatpush2.msra.mxu0 0.0
    %517 = vmatprep.subr.mxu0 0.0
    %518 = vmatpush2.msra.mxu0 0.0
    %519 = vmatprep.subr.mxu0 0.0
    %520 = vmatpush2.msra.mxu0 0.0
    %521 = vmatprep.subr.mxu0 0.0
    %522 = vmatpush2.msra.mxu0 0.0
    %523 = vmatprep.subr.mxu0 0.0
    %524 = vmatpush2.msra.mxu0 0.0
    %525 = vmatprep.subr.mxu0 0.0
    %526 = vmatpush2.msra.mxu0 0.0
    %527 = vmatprep.subr.mxu0 0.0
    %528 = vmatpush2.msra.mxu0 0.0
    %529 = vmatprep.subr.mxu0 0.0
    %530 = vmatpush2.msra.mxu0 0.0
    %531 = vmatprep.subr.mxu0 0.0
    %532 = vmatpush2.msra.mxu0 0.0
    %533 = vmatprep.subr.mxu0 0.0
    %534 = vmatpush2.msra.mxu0 0.0
    %535 = vmatprep.subr.mxu0 0.0
    %536 = vmatpush2.msra.mxu0 0.0
    %537 = vmatprep.subr.mxu0 0.0
    %538 = vmatpush2.msra.mxu0 0.0
    %539 = vmatprep.subr.mxu0 0.0
    %540 = vmatpush2.msra.mxu0 0.0
    %541 = vmatprep.subr.mxu0 0.0
    %542 = vmatpush2.msra.mxu0 0.0
    %543 = vmatprep.mubr.f32.mxu0 0.0
    %544 = vmatmul.mubr.f32.gmra.mxu0 %v477
    %v545 = vpop.f32.mrf.mxu0
    %v546 = vadd.f32 %v475, %v545
    %v547 = vpop.f32.mrf.mxu0
    %548 = vdwg.mxu0
    %549 = vst.msk [vmem:[#allocation11] sm:$0xff] %vm121, %v546
    // Predicated region
    $region62: #{tpu_custom_call.1} parent=1 // pred_check
      _
    $region63: #{tpu_custom_call.1} parent=1 // pred_check_branch
      %551 = sbr.rel (0) target = $region65
    $region64: #{tpu_custom_call.1} parent=1 // pred_region
      %s553 = ssub.s32 128, 128
      %554 = vsyncadd [#allocation4], %s553
      %s556 = sshll.u32 [#allocation11], 4
      %s557 = int_to_ptr.vmem [resolvable:$true] %s556
      %559 = dma.vmem_to_hbm [thread:$0]  %s557, 128, %s10, [#allocation4]
    $region65: #{tpu_custom_call.1} parent=1 // pred_fallthru
      _
    // Predicated region
    $region66: #{tpu_custom_call.1} parent=1 // pred_check
      _
    $region67: #{tpu_custom_call.1} parent=1 // pred_check_branch
      %561 = sbr.rel (0) target = $region69
    $region68: #{tpu_custom_call.1} parent=1 // pred_region
      %s563 = ssub.s32 256, 256
      %564 = vsyncadd [#allocation13], %s563
      %s565 = sshll.u32 [#allocation12], 4
      %s566 = int_to_ptr.vmem [resolvable:$true] %s565
      %571 = dma.vmem_to_hbm [thread:$0]  %s566, 256, %s11, [#allocation13], 128, 128, 8
    $region69: #{tpu_custom_call.1} parent=1 // pred_fallthru
      _
    // Predicated region
    $region70: #{tpu_custom_call.1} parent=1 // pred_check
      _
    $region71: #{tpu_custom_call.1} parent=1 // pred_check_branch
      %573 = sbr.rel (0) target = $region73
    $region72: #{tpu_custom_call.1} parent=1 // pred_region
      %s575 = ssub.s32 256, 256
      %576 = vsyncadd [#allocation13], %s575
      %s577 = sshll.u32 [#allocation14], 4
      %s578 = int_to_ptr.vmem [resolvable:$true] %s577
      %583 = dma.vmem_to_hbm [thread:$0]  %s578, 256, %s12, [#allocation13], 128, 128, 8
    $region73: #{tpu_custom_call.1} parent=1 // pred_fallthru
      _
    // Predicated region
    $region74: #{tpu_custom_call.1} parent=1 // pred_check
      _
    $region75: #{tpu_custom_call.1} parent=1 // pred_check_branch
      %585 = sbr.rel (0) target = $region77
    $region76: #{tpu_custom_call.1} parent=1 // pred_region
      %586 = dma.done [#allocation4], 128
    $region77: #{tpu_custom_call.1} parent=1 // pred_fallthru
      _
    // Predicated region
    $region78: #{tpu_custom_call.1} parent=1 // pred_check
      _
    $region79: #{tpu_custom_call.1} parent=1 // pred_check_branch
      %588 = sbr.rel (0) target = $region81
    $region80: #{tpu_custom_call.1} parent=1 // pred_region
      %589 = dma.done [#allocation13], 256
    $region81: #{tpu_custom_call.1} parent=1 // pred_fallthru
      _
    // Predicated region
    $region82: #{tpu_custom_call.1} parent=1 // pred_check
      _
    $region83: #{tpu_custom_call.1} parent=1 // pred_check_branch
      %591 = sbr.rel (0) target = $region85
    $region84: #{tpu_custom_call.1} parent=1 // pred_region
      %592 = dma.done [#allocation13], 256
    $region85: #{tpu_custom_call.1} parent=1 // pred_fallthru
      _
    %593 = vsyncpa [#allocation3], 1
    %594 = vsyncpa [#allocation6], 1
    %595 = vsyncpa [#allocation9], 1
    %596 = vsyncpa [#allocation4], 1
    %597 = vsyncpa [#allocation13], 1

</llo_original>
